<compile_context>
chip_gen: v5e
topology: v5e:2x2
jax: 0.10.0
libtpu: 0.0.40
codegen_flags: <defaults>
</compile_context>

<pallas_src>
import jax
import jax.numpy as jnp
from jax.experimental import pallas as pl
from jax.experimental.pallas import tpu as pltpu


def _linear_t_kernel(xt_ref, w_ref, b_ref, ot_ref):
    # xt_ref: [IN, B]   x transposed -> batch on the lane axis
    # w_ref:  [OUT, IN] PyTorch weight layout
    # b_ref:  [OUT, 1]
    # ot_ref: [OUT, B]  y transposed -> lane-dense store along batch
    xt = xt_ref[...].astype(jnp.float32)
    w = w_ref[...].astype(jnp.float32)
    in_f = w_ref.shape[1]

    # Start from the broadcast bias, accumulate in f32.
    acc = jnp.broadcast_to(b_ref[...].astype(jnp.float32), ot_ref.shape)

    # Unrolled K=IN contraction on the VPU (broadcast-FMA per k).
    # A 4-wide RHS would occupy <0.1% of the systolic array, so the MXU is skipped.
    for k in range(in_f):
        acc = acc + w[:, k:k + 1] * xt[k:k + 1, :]

    ot_ref[...] = acc.astype(ot_ref.dtype)


@jax.jit
def linear_pallas(x, w, b):
    """y = x @ w.T + b  (PyTorch nn.Linear semantics)."""
    batch, _in_f = x.shape
    out_f = w.shape[0]

    xt = x.T                      # [in_f, batch]  -> batch on lanes inside kernel
    b2 = b.reshape(out_f, 1)      # keep 2-D for TPU layout

    vmem_spec = pl.BlockSpec(memory_space=pltpu.MemorySpace.VMEM)

    ot = pl.pallas_call(
        _linear_t_kernel,
        out_shape=jax.ShapeDtypeStruct((out_f, batch), x.dtype),
        in_specs=[vmem_spec, vmem_spec, vmem_spec],
        out_specs=vmem_spec,
    )(xt, w, b2)

    return ot.T                   # back to [batch, out_f] module semantics


class Level3Params:
    """Deterministic parameters mirroring Level3.__init__ shapes."""

    def __init__(self, key):
        k1, k2, k3, k4 = jax.random.split(key, 4)
        # layer2.layer1a.layer0 : Linear(4, 4)
        self.w1a = jax.random.normal(k1, (4, 4), jnp.float32) * 0.5
        self.b1a = jax.random.normal(k2, (4,), jnp.float32) * 0.1
        # layer2.layer1b : Linear(4, 4)  (only used when x is None)
        self.w1b = jax.random.normal(k3, (4, 4), jnp.float32) * 0.5
        self.b1b = jax.random.normal(k4, (4,), jnp.float32) * 0.1


def level3_forward(params, x, y=None):
    if x is not None and y is not None:
        raise ValueError("x and y set simultaneously")
    if x is not None:
        return linear_pallas(x, params.w1a, params.b1a)
    else:
        return linear_pallas(y, params.w1b, params.b1b)


if __name__ == "__main__":
    key = jax.random.PRNGKey(0)
    pkey, xkey = jax.random.split(key)
    params = Level3Params(pkey)

    # small input consistent with Linear(4, 4): batch=8, features=4
    x = jax.random.normal(xkey, (8, 4), jnp.float32)

    out = level3_forward(params, x)
    out = jax.block_until_ready(out)

    # correctness check against plain-JAX reference of nn.Linear
    ref = x @ params.w1a.T + params.b1a
    assert out.shape == (8, 4)
    assert jnp.allclose(out, ref, atol=1e-5, rtol=1e-5)

    # also exercise the y-branch (layer1b) once for coverage
    out_y = jax.block_until_ready(level3_forward(params, None, y=x))
    ref_y = x @ params.w1b.T + params.b1b
    assert jnp.allclose(out_y, ref_y, atol=1e-5, rtol=1e-5)

    print("KERNEL_OK")
</pallas_src>

<mosaic_0001>
module attributes {stable_mosaic.version = 11 : i64} {
  func.func @_linear_t_kernel(%arg0: memref<4x8xf32, #tpu.memory_space<vmem>>, %arg1: memref<4x4xf32, #tpu.memory_space<vmem>>, %arg2: memref<4x1xf32, #tpu.memory_space<vmem>>, %arg3: memref<4x8xf32, #tpu.memory_space<vmem>>) attributes {dimension_semantics = [], scalar_prefetch = 0 : i64, scratch_operands = 0 : i64, tpu.core_type = #tpu.core_type<tc>} {
    %c0 = arith.constant 0 : index
    %c0_0 = arith.constant 0 : index
    %0 = vector.load %arg0[%c0, %c0_0] : memref<4x8xf32, #tpu.memory_space<vmem>>, vector<4x8xf32>
    %c0_1 = arith.constant 0 : index
    %c0_2 = arith.constant 0 : index
    %1 = vector.load %arg1[%c0_1, %c0_2] : memref<4x4xf32, #tpu.memory_space<vmem>>, vector<4x4xf32>
    %c0_3 = arith.constant 0 : index
    %c0_4 = arith.constant 0 : index
    %2 = vector.load %arg2[%c0_3, %c0_4] : memref<4x1xf32, #tpu.memory_space<vmem>>, vector<4x1xf32>
    %3 = vector.shape_cast %2 : vector<4x1xf32> to vector<4x1xf32>
    %4 = vector.broadcast %3 : vector<4x1xf32> to vector<4x8xf32>
    %5 = vector.extract_strided_slice %1 {offsets = [0, 0], sizes = [4, 1], strides = [1, 1]} : vector<4x4xf32> to vector<4x1xf32>
    %6 = vector.extract_strided_slice %0 {offsets = [0, 0], sizes = [1, 8], strides = [1, 1]} : vector<4x8xf32> to vector<1x8xf32>
    %7 = vector.broadcast %5 : vector<4x1xf32> to vector<4x8xf32>
    %8 = vector.broadcast %6 : vector<1x8xf32> to vector<4x8xf32>
    %9 = arith.mulf %7, %8 : vector<4x8xf32>
    %10 = arith.addf %4, %9 : vector<4x8xf32>
    %11 = vector.extract_strided_slice %1 {offsets = [0, 1], sizes = [4, 1], strides = [1, 1]} : vector<4x4xf32> to vector<4x1xf32>
    %12 = vector.extract_strided_slice %0 {offsets = [1, 0], sizes = [1, 8], strides = [1, 1]} : vector<4x8xf32> to vector<1x8xf32>
    %13 = vector.broadcast %11 : vector<4x1xf32> to vector<4x8xf32>
    %14 = vector.broadcast %12 : vector<1x8xf32> to vector<4x8xf32>
    %15 = arith.mulf %13, %14 : vector<4x8xf32>
    %16 = arith.addf %10, %15 : vector<4x8xf32>
    %17 = vector.extract_strided_slice %1 {offsets = [0, 2], sizes = [4, 1], strides = [1, 1]} : vector<4x4xf32> to vector<4x1xf32>
    %18 = vector.extract_strided_slice %0 {offsets = [2, 0], sizes = [1, 8], strides = [1, 1]} : vector<4x8xf32> to vector<1x8xf32>
    %19 = vector.broadcast %17 : vector<4x1xf32> to vector<4x8xf32>
    %20 = vector.broadcast %18 : vector<1x8xf32> to vector<4x8xf32>
    %21 = arith.mulf %19, %20 : vector<4x8xf32>
    %22 = arith.addf %16, %21 : vector<4x8xf32>
    %23 = vector.extract_strided_slice %1 {offsets = [0, 3], sizes = [4, 1], strides = [1, 1]} : vector<4x4xf32> to vector<4x1xf32>
    %24 = vector.extract_strided_slice %0 {offsets = [3, 0], sizes = [1, 8], strides = [1, 1]} : vector<4x8xf32> to vector<1x8xf32>
    %25 = vector.broadcast %23 : vector<4x1xf32> to vector<4x8xf32>
    %26 = vector.broadcast %24 : vector<1x8xf32> to vector<4x8xf32>
    %27 = arith.mulf %25, %26 : vector<4x8xf32>
    %28 = arith.addf %22, %27 : vector<4x8xf32>
    %c0_5 = arith.constant 0 : index
    %c0_6 = arith.constant 0 : index
    %29 = vector.load %arg3[%c0_5, %c0_6] : memref<4x8xf32, #tpu.memory_space<vmem>>, vector<4x8xf32>
    tpu.vector_store %arg3[%c0_5, %c0_6], %28 {strides = array<i32>} : memref<4x8xf32, #tpu.memory_space<vmem>>, vector<4x8xf32>,
    return
  }
}

</mosaic_0001>

<llo_original>
// kernel: linear_pallas.1
$region0: #{linear_pallas.1}
  #allocation0 [shape = 'u32[]', space=smem, size = 0x4, offset = 0x4, fixed_abs, tag = 'smem constant byte address 0x4 - core index']
  #allocation1 [shape = 'u32[72,128]{1,0:T(1,128)}', space=vmem, size = 0x9000, scoped, tag = 'internal scratch']
  %s0 = inlined_call_operand.vmem [shape: f32[4,8], index: 0, kind: input, shape index: {}]
  %s1 = inlined_call_operand.hbm [shape: f32[4,4], index: 1, kind: input, shape index: {}]
  %s2 = inlined_call_operand.vmem [shape: f32[4,1], index: 2, kind: input, shape index: {}]
  %s3 = inlined_call_operand.hbm [shape: f32[4,8], index: 3, kind: output, shape index: {}]
  %s4 = sld [smem:[#allocation0]]
  $region26: #{linear_pallas.1} parent=0
    _
  %s6 = ssub.s32 1, %s4
  %s7 = scalar_select 0, %s6, %s4
  $region1: #{linear_pallas.1} parent=0
    #allocation2 [shape = 'u8[2048]{0}', space=vmem, size = 0x800, scoped, tag = 'input window, operand 1, single buffered']
    #allocation3 [shape = 's32[1]{0}', space=sflag, size = 0x4, scoped, tag = 'scoped memory for linear_pallas.1']
    #allocation4 [shape = 's32[1]{0}', space=sflag, size = 0x4, scoped, tag = 'scoped memory for linear_pallas.1']
    #allocation5 [shape = 'u8[2048]{0}', space=vmem, size = 0x800, scoped, tag = 'output window, operand 0, single buffered']
    %8 = vsyncpa [#allocation3], 0
    %9 = vsyncpa [#allocation4], 0
    // Predicated region
    $region2: #{linear_pallas.1} parent=1 // pred_check
      _
    $region3: #{linear_pallas.1} parent=1 // pred_check_branch
      %11 = sbr.rel (0) target = $region5
    $region4: #{linear_pallas.1} parent=1 // pred_region
      _
    $region5: #{linear_pallas.1} parent=1 // pred_fallthru
      _
    // Predicated region
    $region6: #{linear_pallas.1} parent=1 // pred_check
      _
    $region7: #{linear_pallas.1} parent=1 // pred_check_branch
      %13 = sbr.rel (0) target = $region9
    $region8: #{linear_pallas.1} parent=1 // pred_region
      %15 = vsyncadd [#allocation3], 0
      %s17 = sshll.u32 %s1, 4
      %s18 = int_to_ptr.hbm [resolvable:$true] %s17
      %s19 = sshll.u32 [#allocation2], 4
      %s20 = int_to_ptr.vmem [resolvable:$true] %s19
      %22 = dma.hbm_to_vmem [thread:$0]  %s18, 64, %s20, [#allocation3]
    $region9: #{linear_pallas.1} parent=1 // pred_fallthru
      _
    // Predicated region
    $region10: #{linear_pallas.1} parent=1 // pred_check
      _
    $region11: #{linear_pallas.1} parent=1 // pred_check_branch
      %24 = sbr.rel (0) target = $region13
    $region12: #{linear_pallas.1} parent=1 // pred_region
      _
    $region13: #{linear_pallas.1} parent=1 // pred_fallthru
      _
    // Predicated region
    $region14: #{linear_pallas.1} parent=1 // pred_check
      _
    $region15: #{linear_pallas.1} parent=1 // pred_check_branch
      %26 = sbr.rel (0) target = $region17
    $region16: #{linear_pallas.1} parent=1 // pred_region
      %28 = dma.done [#allocation3], 64
    $region17: #{linear_pallas.1} parent=1 // pred_fallthru
      _
    %v29 = vld [vmem:[%s0] sm:$0xf]
    %v30 = vld [vmem:[#allocation2] sm:$0xf]
    %v31 = vld [vmem:[%s2] sm:$0xf]
    %33 = vset.pattern.permute.xlu0 0
    %34 = vperm.xlu0 %33, %v31
    %v35 = vpop.permute.xlu0 %34
    %38 = vset.pattern.permute.xlu0 0
    %39 = vperm.xlu0 %38, %v30
    %v40 = vpop.permute.xlu0 %39
    %v42 = vperm.slane %v29, 0
    %v43 = vmul.f32 %v40, %v42
    %v44 = vadd.f32 %v35, %v43
    %45 = vset.pattern.permute.xlu0 1
    %46 = vperm.xlu0 %45, %v30
    %v47 = vpop.permute.xlu0 %46
    %v49 = vperm.slane %v29, 1
    %v50 = vmul.f32 %v47, %v49
    %v51 = vadd.f32 %v44, %v50
    %52 = vset.pattern.permute.xlu0 2
    %53 = vperm.xlu0 %52, %v30
    %v54 = vpop.permute.xlu0 %53
    %v56 = vperm.slane %v29, 2
    %v57 = vmul.f32 %v54, %v56
    %v58 = vadd.f32 %v51, %v57
    %59 = vset.pattern.permute.xlu0 3
    %60 = vperm.xlu0 %59, %v30
    %v61 = vpop.permute.xlu0 %60
    %v63 = vperm.slane %v29, 3
    %v64 = vmul.f32 %v61, %v63
    %v65 = vadd.f32 %v58, %v64
    %vm66 = vcmask 60416
    %67 = vst.msk [vmem:[#allocation5] sm:$0xf] %vm66, %v65
    // Predicated region
    $region18: #{linear_pallas.1} parent=1 // pred_check
      _
    $region19: #{linear_pallas.1} parent=1 // pred_check_branch
      %69 = sbr.rel (0) target = $region21
    $region20: #{linear_pallas.1} parent=1 // pred_region
      %71 = vsyncadd [#allocation4], 0
      %s73 = sshll.u32 [#allocation5], 4
      %s74 = int_to_ptr.vmem [resolvable:$true] %s73
      %s75 = sshll.u32 %s3, 4
      %s76 = int_to_ptr.hbm [resolvable:$true] %s75
      %78 = dma.vmem_to_hbm [thread:$0]  %s74, 64, %s76, [#allocation4]
    $region21: #{linear_pallas.1} parent=1 // pred_fallthru
      _
    // Predicated region
    $region22: #{linear_pallas.1} parent=1 // pred_check
      _
    $region23: #{linear_pallas.1} parent=1 // pred_check_branch
      %80 = sbr.rel (0) target = $region25
    $region24: #{linear_pallas.1} parent=1 // pred_region
      %82 = dma.done [#allocation4], 64
    $region25: #{linear_pallas.1} parent=1 // pred_fallthru
      _
    %83 = vsyncpa [#allocation3], 1
    %84 = vsyncpa [#allocation4], 1

</llo_original>
